<compile_context>
chip_gen: v5e
topology: v5e:2x2
jax: 0.10.0
libtpu: 0.0.40
codegen_flags: <defaults>
</compile_context>

<pallas_src>
import jax
import jax.numpy as jnp
from jax import lax
from jax.experimental import pallas as pl
from jax.experimental.pallas import tpu as pltpu


def _make_attn_kernel(has_dropout: bool):
    """Build a kernel specialized on whether dropout is active (trace-time)."""

    def kernel(inv_scale_ref,                       # SMEM (1,)  = 1/scale
               q_ref, k_ref, v_ref,                 # (1, S, Din) VMEM tiles
               wq_ref, bq_ref, wk_ref, bk_ref, wv_ref, bv_ref,  # weights
               *rest):                              # [mask_ref,] o_ref
        if has_dropout:
            mask_ref, o_ref = rest
        else:
            (o_ref,) = rest

        q = q_ref[0]            # (Sq, Din)
        k = k_ref[0]            # (Sk, Din)
        v = v_ref[0]            # (Sk, Din)
        inv_scale = inv_scale_ref[0]

        # Linear projections on the MXU; fold 1/scale into Q (Sq*H elements,
        # cheaper than scaling the Sq*Sk score matrix).
        Q = (jnp.dot(q, wq_ref[...], preferred_element_type=jnp.float32)
             + bq_ref[...]) * inv_scale
        K = jnp.dot(k, wk_ref[...], preferred_element_type=jnp.float32) + bk_ref[...]
        V = jnp.dot(v, wv_ref[...], preferred_element_type=jnp.float32) + bv_ref[...]

        # Scores: Q @ K^T without materializing a transpose.
        s = lax.dot_general(Q, K,
                            dimension_numbers=(((1,), (1,)), ((), ())),
                            preferred_element_type=jnp.float32)

        if has_dropout:
            # mask carries {0, 1/(1-p)} -> one vmul per score element.
            s = s * mask_ref[0]

        o_ref[0] = jnp.dot(s, V,
                           preferred_element_type=jnp.float32).astype(o_ref.dtype)

    return kernel


def model_forward(query, key, value, scale_factor, dropout_p, params, seed=0):
    """params: dict with wq,bq,wk,bk,wv,bv  (wX: (Din,H) already transposed,
    bX: (1,H)). dropout_p is a Python float -> trace-time specialization."""
    B, Sq, Din = query.shape
    _, Sk, _ = key.shape
    H = params["wq"].shape[1]

    p = float(dropout_p)
    has_dropout = p > 0.0

    # 1/scale computed once host-side; passed as a runtime SMEM scalar.
    inv_scale = (jnp.float32(1.0)
                 / jnp.asarray(scale_factor, jnp.float32).reshape(-1)[0]).reshape(1)

    smem_spec = pl.BlockSpec(memory_space=pltpu.SMEM)
    qkv_spec = lambda S: pl.BlockSpec((1, S, Din), lambda b: (b, 0, 0))
    w_spec = pl.BlockSpec((Din, H), lambda b: (0, 0))
    b_spec = pl.BlockSpec((1, H), lambda b: (0, 0))

    in_specs = [
        smem_spec,                                   # inv_scale
        qkv_spec(Sq), qkv_spec(Sk), qkv_spec(Sk),    # query, key, value
        w_spec, b_spec, w_spec, b_spec, w_spec, b_spec,
    ]
    inputs = [inv_scale, query, key, value,
              params["wq"], params["bq"],
              params["wk"], params["bk"],
              params["wv"], params["bv"]]

    if has_dropout:
        # Precomputed inverted-dropout mask with the 1/(1-p) scale folded in.
        # TODO(synk): an in-kernel pltpu.prng_random_bits mask would avoid the
        # HBM mask traffic, but that primitive has no CPU/interpret lowering;
        # RNG stream differs from PyTorch in either case.
        keep_scale = 0.0 if p >= 1.0 else 1.0 / (1.0 - p)
        keep = jax.random.bernoulli(jax.random.PRNGKey(seed), 1.0 - p, (B, Sq, Sk))
        mask = keep.astype(jnp.float32) * jnp.float32(keep_scale)
        in_specs.append(pl.BlockSpec((1, Sq, Sk), lambda b: (b, 0, 0)))
        inputs.append(mask)

    out = pl.pallas_call(
        _make_attn_kernel(has_dropout),
        out_shape=jax.ShapeDtypeStruct((B, Sq, H), jnp.float32),
        grid=(B,),
        in_specs=in_specs,
        out_specs=pl.BlockSpec((1, Sq, H), lambda b: (b, 0, 0)),
        compiler_params=pltpu.CompilerParams(
            dimension_semantics=("parallel",),       # disjoint output per b
            vmem_limit_bytes=32 * 1024 * 1024),
    )(*inputs)
    return out


def _reference(query, key, value, scale_factor, params):
    # pure-JAX reference with dropout_p = 0
    Q = query @ params["wq"] + params["bq"]
    K = key @ params["wk"] + params["bk"]
    V = value @ params["wv"] + params["bv"]
    s = jnp.einsum("bqh,bkh->bqk", Q, K) / scale_factor
    return jnp.einsum("bqk,bkh->bqh", s, V)


if __name__ == "__main__":
    # Small shapes consistent with the module's forward
    B, Sq, Sk = 2, 8, 8
    input_dim, hidden_dim = 4, 32

    key0 = jax.random.PRNGKey(0)
    ks = jax.random.split(key0, 10)

    query = jax.random.normal(ks[0], (B, Sq, input_dim), jnp.float32)
    key_t = jax.random.normal(ks[1], (B, Sk, input_dim), jnp.float32)
    value = jax.random.normal(ks[2], (B, Sk, input_dim), jnp.float32)

    # Deterministic "Linear" parameters (PyTorch layout (H, Din) -> transposed)
    wq_t = jax.random.normal(ks[3], (hidden_dim, input_dim), jnp.float32) * 0.1
    wk_t = jax.random.normal(ks[4], (hidden_dim, input_dim), jnp.float32) * 0.1
    wv_t = jax.random.normal(ks[5], (hidden_dim, input_dim), jnp.float32) * 0.1
    bq = jax.random.normal(ks[6], (hidden_dim,), jnp.float32) * 0.1
    bk = jax.random.normal(ks[7], (hidden_dim,), jnp.float32) * 0.1
    bv = jax.random.normal(ks[8], (hidden_dim,), jnp.float32) * 0.1

    params = dict(
        wq=wq_t.T, bq=bq.reshape(1, hidden_dim),
        wk=wk_t.T, bk=bk.reshape(1, hidden_dim),
        wv=wv_t.T, bv=bv.reshape(1, hidden_dim),
    )

    scale_factor = 0.75   # stands in for torch.randn(1) scalar
    dropout_p = 0.0       # deterministic check; kernel supports p > 0 too

    out = model_forward(query, key_t, value, scale_factor, dropout_p, params)
    out = jax.block_until_ready(out)

    ref = _reference(query, key_t, value, scale_factor, params)
    assert out.shape == (B, Sq, hidden_dim)
    assert jnp.allclose(out, ref, atol=1e-4, rtol=1e-4)

    # also exercise the dropout-specialized variant (p > 0)
    out_drop = jax.block_until_ready(
        model_forward(query, key_t, value, scale_factor, 0.3, params, seed=7))
    assert out_drop.shape == (B, Sq, hidden_dim)
    assert bool(jnp.all(jnp.isfinite(out_drop)))

    print("KERNEL_OK")
</pallas_src>

<mosaic_0001>
module attributes {stable_mosaic.version = 11 : i64} {
  func.func @kernel(%arg0: i32, %arg1: memref<1xf32, #tpu.memory_space<smem>>, %arg2: memref<1x8x4xf32, #tpu.memory_space<vmem>>, %arg3: memref<1x8x4xf32, #tpu.memory_space<vmem>>, %arg4: memref<1x8x4xf32, #tpu.memory_space<vmem>>, %arg5: memref<4x32xf32, #tpu.memory_space<vmem>>, %arg6: memref<1x32xf32, #tpu.memory_space<vmem>>, %arg7: memref<4x32xf32, #tpu.memory_space<vmem>>, %arg8: memref<1x32xf32, #tpu.memory_space<vmem>>, %arg9: memref<4x32xf32, #tpu.memory_space<vmem>>, %arg10: memref<1x32xf32, #tpu.memory_space<vmem>>, %arg11: memref<1x8x32xf32, #tpu.memory_space<vmem>>) attributes {dimension_semantics = [#tpu.dimension_semantics<parallel>], iteration_bounds = array<i64: 2>, scalar_prefetch = 0 : i64, scratch_operands = 0 : i64, tpu.core_type = #tpu.core_type<tc>, window_params = [{transform_indices = @transform_0, window_bounds = array<i64: 1>}, {transform_indices = @transform_1, window_bounds = array<i64: 1, 8, 4>}, {transform_indices = @transform_2, window_bounds = array<i64: 1, 8, 4>}, {transform_indices = @transform_3, window_bounds = array<i64: 1, 8, 4>}, {pipeline_mode = #tpu.pipeline_mode<synchronous>, transform_indices = @transform_4, window_bounds = array<i64: 4, 32>}, {pipeline_mode = #tpu.pipeline_mode<synchronous>, transform_indices = @transform_5, window_bounds = array<i64: 1, 32>}, {pipeline_mode = #tpu.pipeline_mode<synchronous>, transform_indices = @transform_6, window_bounds = array<i64: 4, 32>}, {pipeline_mode = #tpu.pipeline_mode<synchronous>, transform_indices = @transform_7, window_bounds = array<i64: 1, 32>}, {pipeline_mode = #tpu.pipeline_mode<synchronous>, transform_indices = @transform_8, window_bounds = array<i64: 4, 32>}, {pipeline_mode = #tpu.pipeline_mode<synchronous>, transform_indices = @transform_9, window_bounds = array<i64: 1, 32>}, {transform_indices = @transform_10, window_bounds = array<i64: 1, 8, 32>}]} {
    %c0 = arith.constant 0 : index
    %c0_0 = arith.constant 0 : index
    %c0_1 = arith.constant 0 : index
    %0 = vector.load %arg2[%c0, %c0_0, %c0_1] : memref<1x8x4xf32, #tpu.memory_space<vmem>>, vector<1x8x4xf32>
    %1 = vector.shape_cast %0 : vector<1x8x4xf32> to vector<8x4xf32>
    %c0_2 = arith.constant 0 : index
    %c0_3 = arith.constant 0 : index
    %c0_4 = arith.constant 0 : index
    %2 = vector.load %arg3[%c0_2, %c0_3, %c0_4] : memref<1x8x4xf32, #tpu.memory_space<vmem>>, vector<1x8x4xf32>
    %3 = vector.shape_cast %2 : vector<1x8x4xf32> to vector<8x4xf32>
    %c0_5 = arith.constant 0 : index
    %c0_6 = arith.constant 0 : index
    %c0_7 = arith.constant 0 : index
    %4 = vector.load %arg4[%c0_5, %c0_6, %c0_7] : memref<1x8x4xf32, #tpu.memory_space<vmem>>, vector<1x8x4xf32>
    %5 = vector.shape_cast %4 : vector<1x8x4xf32> to vector<8x4xf32>
    %c0_8 = arith.constant 0 : index
    %6 = memref.load %arg1[%c0_8] : memref<1xf32, #tpu.memory_space<smem>>
    %c0_9 = arith.constant 0 : index
    %c0_10 = arith.constant 0 : index
    %7 = vector.load %arg5[%c0_9, %c0_10] : memref<4x32xf32, #tpu.memory_space<vmem>>, vector<4x32xf32>
    %cst = arith.constant dense<0.000000e+00> : vector<8x32xf32>
    %8 = tpu.matmul %1, %7, %cst {dimension_numbers = #tpu.dot_dimension_numbers<[1], [0], [0], [1], [0, 0, 1, 1], [], []>} : vector<8x4xf32>, vector<4x32xf32>, vector<8x32xf32> -> vector<8x32xf32>
    %c0_11 = arith.constant 0 : index
    %c0_12 = arith.constant 0 : index
    %9 = vector.load %arg6[%c0_11, %c0_12] : memref<1x32xf32, #tpu.memory_space<vmem>>, vector<1x32xf32>
    %10 = vector.broadcast %9 : vector<1x32xf32> to vector<8x32xf32>
    %11 = arith.addf %8, %10 : vector<8x32xf32>
    %12 = vector.broadcast %6 : f32 to vector<8x32xf32>
    %13 = arith.mulf %11, %12 : vector<8x32xf32>
    %c0_13 = arith.constant 0 : index
    %c0_14 = arith.constant 0 : index
    %14 = vector.load %arg7[%c0_13, %c0_14] : memref<4x32xf32, #tpu.memory_space<vmem>>, vector<4x32xf32>
    %cst_15 = arith.constant dense<0.000000e+00> : vector<8x32xf32>
    %15 = tpu.matmul %3, %14, %cst_15 {dimension_numbers = #tpu.dot_dimension_numbers<[1], [0], [0], [1], [0, 0, 1, 1], [], []>} : vector<8x4xf32>, vector<4x32xf32>, vector<8x32xf32> -> vector<8x32xf32>
    %c0_16 = arith.constant 0 : index
    %c0_17 = arith.constant 0 : index
    %16 = vector.load %arg8[%c0_16, %c0_17] : memref<1x32xf32, #tpu.memory_space<vmem>>, vector<1x32xf32>
    %17 = vector.broadcast %16 : vector<1x32xf32> to vector<8x32xf32>
    %18 = arith.addf %15, %17 : vector<8x32xf32>
    %c0_18 = arith.constant 0 : index
    %c0_19 = arith.constant 0 : index
    %19 = vector.load %arg9[%c0_18, %c0_19] : memref<4x32xf32, #tpu.memory_space<vmem>>, vector<4x32xf32>
    %cst_20 = arith.constant dense<0.000000e+00> : vector<8x32xf32>
    %20 = tpu.matmul %5, %19, %cst_20 {dimension_numbers = #tpu.dot_dimension_numbers<[1], [0], [0], [1], [0, 0, 1, 1], [], []>} : vector<8x4xf32>, vector<4x32xf32>, vector<8x32xf32> -> vector<8x32xf32>
    %c0_21 = arith.constant 0 : index
    %c0_22 = arith.constant 0 : index
    %21 = vector.load %arg10[%c0_21, %c0_22] : memref<1x32xf32, #tpu.memory_space<vmem>>, vector<1x32xf32>
    %22 = vector.broadcast %21 : vector<1x32xf32> to vector<8x32xf32>
    %23 = arith.addf %20, %22 : vector<8x32xf32>
    %cst_23 = arith.constant dense<0.000000e+00> : vector<8x8xf32>
    %24 = tpu.matmul %13, %18, %cst_23 {dimension_numbers = #tpu.dot_dimension_numbers<[1], [1], [0], [0], [0, 0, 1, 0], [], []>} : vector<8x32xf32>, vector<8x32xf32>, vector<8x8xf32> -> vector<8x8xf32>
    %cst_24 = arith.constant dense<0.000000e+00> : vector<8x32xf32>
    %25 = tpu.matmul %24, %23, %cst_24 {dimension_numbers = #tpu.dot_dimension_numbers<[1], [0], [0], [1], [0, 0, 1, 1], [], []>} : vector<8x8xf32>, vector<8x32xf32>, vector<8x32xf32> -> vector<8x32xf32>
    %c0_25 = arith.constant 0 : index
    %c0_26 = arith.constant 0 : index
    %c0_27 = arith.constant 0 : index
    %26 = vector.load %arg11[%c0_25, %c0_26, %c0_27] : memref<1x8x32xf32, #tpu.memory_space<vmem>>, vector<1x8x32xf32>
    %27 = vector.shape_cast %26 : vector<1x8x32xf32> to vector<8x32xf32>
    %28 = vector.shape_cast %25 : vector<8x32xf32> to vector<1x8x32xf32>
    tpu.vector_store %arg11[%c0_25, %c0_26, %c0_27], %28 {strides = array<i32>} : memref<1x8x32xf32, #tpu.memory_space<vmem>>, vector<1x8x32xf32>,
    return
  }
  func.func @transform_0(%arg0: i32) -> i32 {
    %c0_i32 = arith.constant 0 : i32
    %c0_i32_0 = arith.constant 0 : i32
    return %c0_i32 : i32
  }
  func.func @transform_1(%arg0: i32) -> (i32, i32, i32) {
    %c0_i32 = arith.constant 0 : i32
    %c0_i32_0 = arith.constant 0 : i32
    %c0_i32_1 = arith.constant 0 : i32
    return %arg0, %c0_i32, %c0_i32_0 : i32, i32, i32
  }
  func.func @transform_2(%arg0: i32) -> (i32, i32, i32) {
    %c0_i32 = arith.constant 0 : i32
    %c0_i32_0 = arith.constant 0 : i32
    %c0_i32_1 = arith.constant 0 : i32
    return %arg0, %c0_i32, %c0_i32_0 : i32, i32, i32
  }
  func.func @transform_3(%arg0: i32) -> (i32, i32, i32) {
    %c0_i32 = arith.constant 0 : i32
    %c0_i32_0 = arith.constant 0 : i32
    %c0_i32_1 = arith.constant 0 : i32
    return %arg0, %c0_i32, %c0_i32_0 : i32, i32, i32
  }
  func.func @transform_4(%arg0: i32) -> (i32, i32) {
    %c0_i32 = arith.constant 0 : i32
    %c0_i32_0 = arith.constant 0 : i32
    %c0_i32_1 = arith.constant 0 : i32
    return %c0_i32, %c0_i32_0 : i32, i32
  }
  func.func @transform_5(%arg0: i32) -> (i32, i32) {
    %c0_i32 = arith.constant 0 : i32
    %c0_i32_0 = arith.constant 0 : i32
    %c0_i32_1 = arith.constant 0 : i32
    return %c0_i32, %c0_i32_0 : i32, i32
  }
  func.func @transform_6(%arg0: i32) -> (i32, i32) {
    %c0_i32 = arith.constant 0 : i32
    %c0_i32_0 = arith.constant 0 : i32
    %c0_i32_1 = arith.constant 0 : i32
    return %c0_i32, %c0_i32_0 : i32, i32
  }
  func.func @transform_7(%arg0: i32) -> (i32, i32) {
    %c0_i32 = arith.constant 0 : i32
    %c0_i32_0 = arith.constant 0 : i32
    %c0_i32_1 = arith.constant 0 : i32
    return %c0_i32, %c0_i32_0 : i32, i32
  }
  func.func @transform_8(%arg0: i32) -> (i32, i32) {
    %c0_i32 = arith.constant 0 : i32
    %c0_i32_0 = arith.constant 0 : i32
    %c0_i32_1 = arith.constant 0 : i32
    return %c0_i32, %c0_i32_0 : i32, i32
  }
  func.func @transform_9(%arg0: i32) -> (i32, i32) {
    %c0_i32 = arith.constant 0 : i32
    %c0_i32_0 = arith.constant 0 : i32
    %c0_i32_1 = arith.constant 0 : i32
    return %c0_i32, %c0_i32_0 : i32, i32
  }
  func.func @transform_10(%arg0: i32) -> (i32, i32, i32) {
    %c0_i32 = arith.constant 0 : i32
    %c0_i32_0 = arith.constant 0 : i32
    %c0_i32_1 = arith.constant 0 : i32
    return %arg0, %c0_i32, %c0_i32_0 : i32, i32, i32
  }
}

</mosaic_0001>

<llo_original>
// kernel: tpu_custom_call.1
$region0: #{tpu_custom_call.1}
  #allocation0 [shape = 'u32[]', space=smem, size = 0x4, offset = 0x4, fixed_abs, tag = 'smem constant byte address 0x4 - core index']
  #allocation1 [shape = 'u32[72,128]{1,0:T(1,128)}', space=vmem, size = 0x9000, scoped, tag = 'internal scratch']
  #allocation2 [shape = 'f32[1]{0:T(128)S(6)}', space=smem, size = 0x200, scoped, tag = 'scoped memory for tpu_custom_call.1']
  %s0 = inlined_call_operand.<no memory space> [shape: f32[1], index: 0, kind: input, shape index: {}]
  %s1 = inlined_call_operand.vmem [shape: f32[2,8,4], index: 1, kind: input, shape index: {}]
  %s2 = inlined_call_operand.vmem [shape: f32[2,8,4], index: 2, kind: input, shape index: {}]
  %s3 = inlined_call_operand.vmem [shape: f32[2,8,4], index: 3, kind: input, shape index: {}]
  %s4 = inlined_call_operand.vmem [shape: f32[4,32], index: 4, kind: input, shape index: {}]
  %s5 = inlined_call_operand.vmem [shape: f32[1,32], index: 5, kind: input, shape index: {}]
  %s6 = inlined_call_operand.vmem [shape: f32[4,32], index: 6, kind: input, shape index: {}]
  %s7 = inlined_call_operand.vmem [shape: f32[1,32], index: 7, kind: input, shape index: {}]
  %s8 = inlined_call_operand.vmem [shape: f32[4,32], index: 8, kind: input, shape index: {}]
  %s9 = inlined_call_operand.vmem [shape: f32[1,32], index: 9, kind: input, shape index: {}]
  %s10 = inlined_call_operand.hbm [shape: f32[2,8,32], index: 10, kind: output, shape index: {}]
  %s11 = sld [smem:[#allocation0]]
  $region73: #{tpu_custom_call.1} parent=0
    _
  %s13 = ssub.s32 1, %s11
  %s14 = scalar_select 0, %s13, %s11
  %15 = sst [smem:[#allocation2]] %s0
  $region1: #{tpu_custom_call.1} parent=0
    #allocation3 [shape = 'u8[8192]{0}', space=vmem, size = 0x2000, scoped, tag = 'output window, operand 0']
    #allocation4 [shape = 's32[2]{0}', space=sflag, size = 0x8, scoped, tag = 'scoped memory for tpu_custom_call.1']
    %16 = vsyncpa [#allocation4], 0
    %s17 = scalar_lea.sflag [#allocation4], 1
    %18 = vsyncpa %s17, 0
    loop: start=0, step=1, limit=4
    $region2: #{tpu_custom_call.1} parent=1 // loop_pre_header
      _
    $region3: #{tpu_custom_call.1} parent=1 // loop_header
      %s20 = sphi 0, %s24
      %p21 = scmp.ge.s32.totalorder %s20, 4
      %s28 = sphi 0, %s28
      %s30 = sphi 0, %s28
      %s31 = sphi 0, %s30
      %s45 = sphi 0, %s31
      %s51 = sphi 0, %s53
      %s54 = sphi 0, %s51
      %s55 = sphi 0, %s54
      %s71 = sphi 0, %s55
      %s77 = sphi 0, %s79
      %s80 = sphi 0, %s77
      %s81 = sphi 0, %s80
      %s97 = sphi 0, %s81
      %s103 = sphi 0, %s105
      %s106 = sphi 0, %s103
      %s107 = sphi 0, %s106
      %s123 = sphi 0, %s107
      %s127 = sphi 0, %s127
      %s129 = sphi 0, %s127
      %s130 = sphi 0, %s129
      %s144 = sphi 0, %s130
      %s148 = sphi 0, %s148
      %s150 = sphi 0, %s148
      %s151 = sphi 0, %s150
      %s165 = sphi 0, %s151
      %s169 = sphi 0, %s169
      %s171 = sphi 0, %s169
      %s172 = sphi 0, %s171
      %s186 = sphi 0, %s172
      %s190 = sphi 0, %s190
      %s192 = sphi 0, %s190
      %s193 = sphi 0, %s192
      %s207 = sphi 0, %s193
      %s211 = sphi 0, %s211
      %s213 = sphi 0, %s211
      %s214 = sphi 0, %s213
      %s228 = sphi 0, %s214
      %s232 = sphi 0, %s232
      %s234 = sphi 0, %s232
      %s235 = sphi 0, %s234
      %s249 = sphi 0, %s235
      %s255 = sphi 0, %s257
      %s258 = sphi 0, %s255
      %s259 = sphi 0, %s258
      %s275 = sphi 0, %s259
    $region4: #{tpu_custom_call.1} parent=1 // loop_header_branch
      %23 = sbr.rel (%p21) target = $region8
    $region5: #{tpu_custom_call.1} parent=1 // loop_body
      %s25 = ssub.s32 %s20, 1
      %s26 = ssub.s32 %s20, 2
      %s27 = sadd.s32 %s20, 1
      %s29 = sadd.s32 %s28, 1
      %p32 = scmp.eq.s32.totalorder %s20, 1
      %p33 = scmp.ne.s32.totalorder %s28, %s30
      %p34 = scmp.eq.s32.totalorder %s20, 0
      %p35 = por %p33, %p34
      %p36 = scmp.ne.s32.totalorder %s28, %s30
      %p37 = scmp.eq.s32.totalorder %s25, 1
      %p38 = por %p36, %p37
      %p39 = scmp.ne.s32.totalorder %s30, %s31
      %p40 = scmp.eq.s32.totalorder %s25, 0
      %p41 = por %p39, %p40
      %p42 = scmp.ne.s32.totalorder %s30, %s31
      %p43 = scmp.eq.s32.totalorder %s26, 1
      %p44 = por %p42, %p43
      %p46 = scmp.ne.s32.totalorder %s31, %s45
      %p47 = scmp.eq.s32.totalorder %s26, 0
      %p48 = por %p46, %p47
      %s49 = ssub.s32 %s20, %s27
      %p50 = scmp.eq.s32.totalorder %s49, 0
      %s52 = sadd.s32 %s51, 1
      %s53 = scalar_select %p50, %s51, %s52
      %p56 = pneg %p50
      %p57 = scmp.eq.s32.totalorder %s20, 1
      %p58 = por %p56, %p57
      %p59 = scmp.ne.s32.totalorder %s51, %s54
      %p60 = scmp.eq.s32.totalorder %s20, 0
      %p61 = por %p59, %p60
      %p62 = scmp.ne.s32.totalorder %s51, %s54
      %p63 = scmp.eq.s32.totalorder %s25, 1
      %p64 = por %p62, %p63
      %p65 = scmp.ne.s32.totalorder %s54, %s55
      %p66 = scmp.eq.s32.totalorder %s25, 0
      %p67 = por %p65, %p66
      %p68 = scmp.ne.s32.totalorder %s54, %s55
      %p69 = scmp.eq.s32.totalorder %s26, 1
      %p70 = por %p68, %p69
      %p72 = scmp.ne.s32.totalorder %s55, %s71
      %p73 = scmp.eq.s32.totalorder %s26, 0
      %p74 = por %p72, %p73
      %s75 = ssub.s32 %s20, %s27
      %p76 = scmp.eq.s32.totalorder %s75, 0
      %s78 = sadd.s32 %s77, 1
      %s79 = scalar_select %p76, %s77, %s78
      %p82 = pneg %p76
      %p83 = scmp.eq.s32.totalorder %s20, 1
      %p84 = por %p82, %p83
      %p85 = scmp.ne.s32.totalorder %s77, %s80
      %p86 = scmp.eq.s32.totalorder %s20, 0
      %p87 = por %p85, %p86
      %p88 = scmp.ne.s32.totalorder %s77, %s80
      %p89 = scmp.eq.s32.totalorder %s25, 1
      %p90 = por %p88, %p89
      %p91 = scmp.ne.s32.totalorder %s80, %s81
      %p92 = scmp.eq.s32.totalorder %s25, 0
      %p93 = por %p91, %p92
      %p94 = scmp.ne.s32.totalorder %s80, %s81
      %p95 = scmp.eq.s32.totalorder %s26, 1
      %p96 = por %p94, %p95
      %p98 = scmp.ne.s32.totalorder %s81, %s97
      %p99 = scmp.eq.s32.totalorder %s26, 0
      %p100 = por %p98, %p99
      %s101 = ssub.s32 %s20, %s27
      %p102 = scmp.eq.s32.totalorder %s101, 0
      %s104 = sadd.s32 %s103, 1
      %s105 = scalar_select %p102, %s103, %s104
      %p108 = pneg %p102
      %p109 = scmp.eq.s32.totalorder %s20, 1
      %p110 = por %p108, %p109
      %p111 = scmp.ne.s32.totalorder %s103, %s106
      %p112 = scmp.eq.s32.totalorder %s20, 0
      %p113 = por %p111, %p112
      %p114 = scmp.ne.s32.totalorder %s103, %s106
      %p115 = scmp.eq.s32.totalorder %s25, 1
      %p116 = por %p114, %p115
      %p117 = scmp.ne.s32.totalorder %s106, %s107
      %p118 = scmp.eq.s32.totalorder %s25, 0
      %p119 = por %p117, %p118
      %p120 = scmp.ne.s32.totalorder %s106, %s107
      %p121 = scmp.eq.s32.totalorder %s26, 1
      %p122 = por %p120, %p121
      %p124 = scmp.ne.s32.totalorder %s107, %s123
      %p125 = scmp.eq.s32.totalorder %s26, 0
      %p126 = por %p124, %p125
      %s128 = sadd.s32 %s127, 1
      %p131 = scmp.eq.s32.totalorder %s20, 1
      %p132 = scmp.ne.s32.totalorder %s127, %s129
      %p133 = scmp.eq.s32.totalorder %s20, 0
      %p134 = por %p132, %p133
      %p135 = scmp.ne.s32.totalorder %s127, %s129
      %p136 = scmp.eq.s32.totalorder %s25, 1
      %p137 = por %p135, %p136
      %p138 = scmp.ne.s32.totalorder %s129, %s130
      %p139 = scmp.eq.s32.totalorder %s25, 0
      %p140 = por %p138, %p139
      %p141 = scmp.ne.s32.totalorder %s129, %s130
      %p142 = scmp.eq.s32.totalorder %s26, 1
      %p143 = por %p141, %p142
      %p145 = scmp.ne.s32.totalorder %s130, %s144
      %p146 = scmp.eq.s32.totalorder %s26, 0
      %p147 = por %p145, %p146
      %s149 = sadd.s32 %s148, 1
      %p152 = scmp.eq.s32.totalorder %s20, 1
      %p153 = scmp.ne.s32.totalorder %s148, %s150
      %p154 = scmp.eq.s32.totalorder %s20, 0
      %p155 = por %p153, %p154
      %p156 = scmp.ne.s32.totalorder %s148, %s150
      %p157 = scmp.eq.s32.totalorder %s25, 1
      %p158 = por %p156, %p157
      %p159 = scmp.ne.s32.totalorder %s150, %s151
      %p160 = scmp.eq.s32.totalorder %s25, 0
      %p161 = por %p159, %p160
      %p162 = scmp.ne.s32.totalorder %s150, %s151
      %p163 = scmp.eq.s32.totalorder %s26, 1
      %p164 = por %p162, %p163
      %p166 = scmp.ne.s32.totalorder %s151, %s165
      %p167 = scmp.eq.s32.totalorder %s26, 0
      %p168 = por %p166, %p167
      %s170 = sadd.s32 %s169, 1
      %p173 = scmp.eq.s32.totalorder %s20, 1
      %p174 = scmp.ne.s32.totalorder %s169, %s171
      %p175 = scmp.eq.s32.totalorder %s20, 0
      %p176 = por %p174, %p175
      %p177 = scmp.ne.s32.totalorder %s169, %s171
      %p178 = scmp.eq.s32.totalorder %s25, 1
      %p179 = por %p177, %p178
      %p180 = scmp.ne.s32.totalorder %s171, %s172
      %p181 = scmp.eq.s32.totalorder %s25, 0
      %p182 = por %p180, %p181
      %p183 = scmp.ne.s32.totalorder %s171, %s172
      %p184 = scmp.eq.s32.totalorder %s26, 1
      %p185 = por %p183, %p184
      %p187 = scmp.ne.s32.totalorder %s172, %s186
      %p188 = scmp.eq.s32.totalorder %s26, 0
      %p189 = por %p187, %p188
      %s191 = sadd.s32 %s190, 1
      %p194 = scmp.eq.s32.totalorder %s20, 1
      %p195 = scmp.ne.s32.totalorder %s190, %s192
      %p196 = scmp.eq.s32.totalorder %s20, 0
      %p197 = por %p195, %p196
      %p198 = scmp.ne.s32.totalorder %s190, %s192
      %p199 = scmp.eq.s32.totalorder %s25, 1
      %p200 = por %p198, %p199
      %p201 = scmp.ne.s32.totalorder %s192, %s193
      %p202 = scmp.eq.s32.totalorder %s25, 0
      %p203 = por %p201, %p202
      %p204 = scmp.ne.s32.totalorder %s192, %s193
      %p205 = scmp.eq.s32.totalorder %s26, 1
      %p206 = por %p204, %p205
      %p208 = scmp.ne.s32.totalorder %s193, %s207
      %p209 = scmp.eq.s32.totalorder %s26, 0
      %p210 = por %p208, %p209
      %s212 = sadd.s32 %s211, 1
      %p215 = scmp.eq.s32.totalorder %s20, 1
      %p216 = scmp.ne.s32.totalorder %s211, %s213
      %p217 = scmp.eq.s32.totalorder %s20, 0
      %p218 = por %p216, %p217
      %p219 = scmp.ne.s32.totalorder %s211, %s213
      %p220 = scmp.eq.s32.totalorder %s25, 1
      %p221 = por %p219, %p220
      %p222 = scmp.ne.s32.totalorder %s213, %s214
      %p223 = scmp.eq.s32.totalorder %s25, 0
      %p224 = por %p222, %p223
      %p225 = scmp.ne.s32.totalorder %s213, %s214
      %p226 = scmp.eq.s32.totalorder %s26, 1
      %p227 = por %p225, %p226
      %p229 = scmp.ne.s32.totalorder %s214, %s228
      %p230 = scmp.eq.s32.totalorder %s26, 0
      %p231 = por %p229, %p230
      %s233 = sadd.s32 %s232, 1
      %p236 = scmp.eq.s32.totalorder %s20, 1
      %p237 = scmp.ne.s32.totalorder %s232, %s234
      %p238 = scmp.eq.s32.totalorder %s20, 0
      %p239 = por %p237, %p238
      %p240 = scmp.ne.s32.totalorder %s232, %s234
      %p241 = scmp.eq.s32.totalorder %s25, 1
      %p242 = por %p240, %p241
      %p243 = scmp.ne.s32.totalorder %s234, %s235
      %p244 = scmp.eq.s32.totalorder %s25, 0
      %p245 = por %p243, %p244
      %p246 = scmp.ne.s32.totalorder %s234, %s235
      %p247 = scmp.eq.s32.totalorder %s26, 1
      %p248 = por %p246, %p247
      %p250 = scmp.ne.s32.totalorder %s235, %s249
      %p251 = scmp.eq.s32.totalorder %s26, 0
      %p252 = por %p250, %p251
      %s253 = ssub.s32 %s20, %s27
      %p254 = scmp.eq.s32.totalorder %s253, 0
      %s256 = sadd.s32 %s255, 1
      %s257 = scalar_select %p254, %s255, %s256
      %p260 = pneg %p254
      %p261 = scmp.eq.s32.totalorder %s20, 1
      %p262 = por %p260, %p261
      %p263 = scmp.ne.s32.totalorder %s255, %s258
      %p264 = scmp.eq.s32.totalorder %s20, 0
      %p265 = por %p263, %p264
      %p266 = scmp.ne.s32.totalorder %s255, %s258
      %p267 = scmp.eq.s32.totalorder %s25, 1
      %p268 = por %p266, %p267
      %p269 = scmp.ne.s32.totalorder %s258, %s259
      %p270 = scmp.eq.s32.totalorder %s25, 0
      %p271 = por %p269, %p270
      %p272 = scmp.ne.s32.totalorder %s258, %s259
      %p273 = scmp.eq.s32.totalorder %s26, 1
      %p274 = por %p272, %p273
      %p276 = scmp.ne.s32.totalorder %s259, %s275
      %p277 = scmp.eq.s32.totalorder %s26, 0
      %p278 = por %p276, %p277
      %p279 = scmp.le.s32.totalorder 1, %s20
      %p280 = scmp.lt.s32.totalorder %s20, 3
      %p281 = pnand %p279, %p280
      %p282 = pneg %p281
      // Predicated region
      $region9: #{tpu_custom_call.1} parent=5 // pred_check
        _
      $region10: #{tpu_custom_call.1} parent=5 // pred_check_branch
        %284 = sbr.rel (%p281) target = $region12
      $region11: #{tpu_custom_call.1} parent=5 // pred_region
        %s285 = ssub.s32 %s20, 1
        // Predicated region
        $region13: #{tpu_custom_call.1} parent=11 // pred_check
          %p286 = pneg %p41
        $region14: #{tpu_custom_call.1} parent=11 // pred_check_branch
          %288 = sbr.rel (%p286) target = $region16
        $region15: #{tpu_custom_call.1} parent=11 // pred_region
          _
        $region16: #{tpu_custom_call.1} parent=11 // pred_fallthru
          _
        // Predicated region
        $region17: #{tpu_custom_call.1} parent=11 // pred_check
          %p289 = pneg %p140
        $region18: #{tpu_custom_call.1} parent=11 // pred_check_branch
          %291 = sbr.rel (%p289) target = $region20
        $region19: #{tpu_custom_call.1} parent=11 // pred_region
          _
        $region20: #{tpu_custom_call.1} parent=11 // pred_fallthru
          _
        // Predicated region
        $region21: #{tpu_custom_call.1} parent=11 // pred_check
          %p292 = pneg %p161
        $region22: #{tpu_custom_call.1} parent=11 // pred_check_branch
          %294 = sbr.rel (%p292) target = $region24
        $region23: #{tpu_custom_call.1} parent=11 // pred_region
          _
        $region24: #{tpu_custom_call.1} parent=11 // pred_fallthru
          _
        // Predicated region
        $region25: #{tpu_custom_call.1} parent=11 // pred_check
          %p295 = pneg %p182
        $region26: #{tpu_custom_call.1} parent=11 // pred_check_branch
          %297 = sbr.rel (%p295) target = $region28
        $region27: #{tpu_custom_call.1} parent=11 // pred_region
          _
        $region28: #{tpu_custom_call.1} parent=11 // pred_fallthru
          _
        // Predicated region
        $region29: #{tpu_custom_call.1} parent=11 // pred_check
          %p298 = pneg %p203
        $region30: #{tpu_custom_call.1} parent=11 // pred_check_branch
          %300 = sbr.rel (%p298) target = $region32
        $region31: #{tpu_custom_call.1} parent=11 // pred_region
          _
        $region32: #{tpu_custom_call.1} parent=11 // pred_fallthru
          _
        // Predicated region
        $region33: #{tpu_custom_call.1} parent=11 // pred_check
          %p301 = pneg %p224
        $region34: #{tpu_custom_call.1} parent=11 // pred_check_branch
          %303 = sbr.rel (%p301) target = $region36
        $region35: #{tpu_custom_call.1} parent=11 // pred_region
          _
        $region36: #{tpu_custom_call.1} parent=11 // pred_fallthru
          _
        // Predicated region
        $region37: #{tpu_custom_call.1} parent=11 // pred_check
          %p304 = pneg %p245
        $region38: #{tpu_custom_call.1} parent=11 // pred_check_branch
          %306 = sbr.rel (%p304) target = $region40
        $region39: #{tpu_custom_call.1} parent=11 // pred_region
          _
        $region40: #{tpu_custom_call.1} parent=11 // pred_fallthru
          _
      $region12: #{tpu_custom_call.1} parent=5 // pred_fallthru
        _
      %p307 = scmp.lt.s32.totalorder %s20, 2
      // Predicated region
      $region41: #{tpu_custom_call.1} parent=5 // pred_check
        %p308 = pneg %p307
      $region42: #{tpu_custom_call.1} parent=5 // pred_check_branch
        %310 = sbr.rel (%p308) target = $region44
      $region43: #{tpu_custom_call.1} parent=5 // pred_region
        // Predicated region
        $region45: #{tpu_custom_call.1} parent=43 // pred_check
          %p311 = pneg %p61
        $region46: #{tpu_custom_call.1} parent=43 // pred_check_branch
          %313 = sbr.rel (%p311) target = $region48
        $region47: #{tpu_custom_call.1} parent=43 // pred_region
          %p314 = scmp.lt.s32.totalorder %s20, 1
          %s315 = scalar_select %p314, %s20, 1
          %s316 = smul.addr %s315, 8
          %s317 = scalar_lea.vmem %s1, %s316
        $region48: #{tpu_custom_call.1} parent=43 // pred_fallthru
          _
        // Predicated region
        $region49: #{tpu_custom_call.1} parent=43 // pred_check
          %p318 = pneg %p87
        $region50: #{tpu_custom_call.1} parent=43 // pred_check_branch
          %320 = sbr.rel (%p318) target = $region52
        $region51: #{tpu_custom_call.1} parent=43 // pred_region
          %p321 = scmp.lt.s32.totalorder %s20, 1
          %s322 = scalar_select %p321, %s20, 1
          %s323 = smul.addr %s322, 8
          %s324 = scalar_lea.vmem %s2, %s323
        $region52: #{tpu_custom_call.1} parent=43 // pred_fallthru
          _
        // Predicated region
        $region53: #{tpu_custom_call.1} parent=43 // pred_check
          %p325 = pneg %p113
        $region54: #{tpu_custom_call.1} parent=43 // pred_check_branch
          %327 = sbr.rel (%p325) target = $region56
        $region55: #{tpu_custom_call.1} parent=43 // pred_region
          %p328 = scmp.lt.s32.totalorder %s20, 1
          %s329 = scalar_select %p328, %s20, 1
          %s330 = smul.addr %s329, 8
          %s331 = scalar_lea.vmem %s3, %s330
        $region56: #{tpu_custom_call.1} parent=43 // pred_fallthru
          _
      $region44: #{tpu_custom_call.1} parent=5 // pred_fallthru
        _
      %p332 = scmp.le.s32.totalorder 1, %s20
      %p333 = scmp.lt.s32.totalorder %s20, 3
      %p334 = pnand %p332, %p333
      %p335 = pneg %p334
      // Predicated region
      $region57: #{tpu_custom_call.1} parent=5 // pred_check
        _
      $region58: #{tpu_custom_call.1} parent=5 // pred_check_branch
        %337 = sbr.rel (%p334) target = $region60
      $region59: #{tpu_custom_call.1} parent=5 // pred_region
        %s338 = ssub.s32 %s20, 1
        %p339 = pneg %p41
        %p340 = pneg %p38
        %p341 = scmp.lt.s32.totalorder %s25, 1
        %s342 = scalar_select %p341, %s25, 1
        %s343 = smul.addr %s342, 8
        %s344 = scalar_lea.vmem %s1, %s343
        %p345 = pneg %p67
        %p346 = pneg %p64
        %p347 = scmp.lt.s32.totalorder %s25, 1
        %s348 = scalar_select %p347, %s25, 1
        %s349 = smul.addr %s348, 8
        %s350 = scalar_lea.vmem %s2, %s349
        %p351 = pneg %p93
        %p352 = pneg %p90
        %p353 = scmp.lt.s32.totalorder %s25, 1
        %s354 = scalar_select %p353, %s25, 1
        %s355 = smul.addr %s354, 8
        %s356 = scalar_lea.vmem %s3, %s355
        %p357 = pneg %p119
        %p358 = pneg %p116
        %p359 = pneg %p140
        %p360 = pneg %p137
        %p361 = pneg %p161
        %p362 = pneg %p158
        %p363 = pneg %p182
        %p364 = pneg %p179
        %p365 = pneg %p203
        %p366 = pneg %p200
        %p367 = pneg %p224
        %p368 = pneg %p221
        %p369 = pneg %p245
        %p370 = pneg %p242
        %p371 = pneg %p271
        %p372 = pneg %p268
        %s373 = sand.u32 %s258, 1
        %s374 = scalar_lea.sflag [#allocation4], %s373
        %s375 = sand.u32 %s258, 1
        %s376 = smul.addr %s375, 8
        %s377 = scalar_lea.vmem [#allocation3], %s376
        %p378 = scmp.lt.s32.totalorder %s25, 1
        %s379 = scalar_select %p378, %s25, 1
        %s380 = smul.addr %s379, 8
        %s381 = scalar_lea.vmem %s1, %s380
        %p382 = scmp.lt.s32.totalorder %s25, 1
        %s383 = scalar_select %p382, %s25, 1
        %s384 = smul.addr %s383, 8
        %s385 = scalar_lea.vmem %s2, %s384
        %p386 = scmp.lt.s32.totalorder %s25, 1
        %s387 = scalar_select %p386, %s25, 1
        %s388 = smul.addr %s387, 8
        %s389 = scalar_lea.vmem %s3, %s388
        %v390 = vld [vmem:[%s381] sm:$0xff]
        %v391 = vld [vmem:[%s385] sm:$0xff]
        %v392 = vld [vmem:[%s389] sm:$0xff]
        %s393 = sld [smem:[#allocation2]]
        %v394 = vld [vmem:[%s4] sm:$0xf]
        %v395 = vld [vmem:[%s5] sm:$0x1]
        %v397 = vperm.slane %v395, 0
        %vm399 = vcmask 31744
        %v401 = vsel %vm399, %v390, 0
        %vm403 = vcmask 1043456
        %v405 = vsel %vm403, %v394, 0
        %407 = vmatpush.msra.mxu0 0.0
        %408 = vmatpush.msra.mxu0 0.0
        %409 = vmatpush.msra.mxu0 0.0
        %410 = vmatpush.msra.mxu0 0.0
        %411 = vmatpush.msra.mxu0 0.0
        %412 = vmatpush.msra.mxu0 0.0
        %413 = vmatpush.msra.mxu0 0.0
        %414 = vmatpush.msra.mxu0 0.0
        %415 = vmatpush.msra.mxu0 0.0
        %416 = vmatpush.msra.mxu0 0.0
        %417 = vmatpush.msra.mxu0 0.0
        %418 = vmatpush.msra.mxu0 0.0
        %419 = vmatpush.msra.mxu0 0.0
        %420 = vmatpush.msra.mxu0 0.0
        %421 = vmatpush.msra.mxu0 0.0
        %422 = vmatpush.msra.mxu0 %v405
        %423 = vmatmul.f32.gmra.mxu0 %v401
        %v424 = vpop.f32.mrf.mxu0
        %v425 = vadd.f32 %v397, %v424
        %426 = vdwg.mxu0
        %v427 = vstv %s393
        %v428 = vmul.f32 %v425, %v427
        %v429 = vld [vmem:[%s6] sm:$0xf]
        %v430 = vld [vmem:[%s7] sm:$0x1]
        %v432 = vperm.slane %v430, 0
        %v435 = vsel %vm399, %v391, 0
        %v438 = vsel %vm403, %v429, 0
        %440 = vmatpush.msra.mxu0 0.0
        %441 = vmatpush.msra.mxu0 0.0
        %442 = vmatpush.msra.mxu0 0.0
        %443 = vmatpush.msra.mxu0 0.0
        %444 = vmatpush.msra.mxu0 0.0
        %445 = vmatpush.msra.mxu0 0.0
        %446 = vmatpush.msra.mxu0 0.0
        %447 = vmatpush.msra.mxu0 0.0
        %448 = vmatpush.msra.mxu0 0.0
        %449 = vmatpush.msra.mxu0 0.0
        %450 = vmatpush.msra.mxu0 0.0
        %451 = vmatpush.msra.mxu0 0.0
        %452 = vmatpush.msra.mxu0 0.0
        %453 = vmatpush.msra.mxu0 0.0
        %454 = vmatpush.msra.mxu0 0.0
        %455 = vmatpush.msra.mxu0 %v438
        %456 = vmatmul.f32.gmra.mxu0 %v435
        %v457 = vpop.f32.mrf.mxu0
        %v458 = vadd.f32 %v432, %v457
        %459 = vdwg.mxu0
        %v460 = vld [vmem:[%s8] sm:$0xf]
        %v461 = vld [vmem:[%s9] sm:$0x1]
        %v463 = vperm.slane %v461, 0
        %v466 = vsel %vm399, %v392, 0
        %v469 = vsel %vm403, %v460, 0
        %471 = vmatpush.msra.mxu0 0.0
        %472 = vmatpush.msra.mxu0 0.0
        %473 = vmatpush.msra.mxu0 0.0
        %474 = vmatpush.msra.mxu0 0.0
        %475 = vmatpush.msra.mxu0 0.0
        %476 = vmatpush.msra.mxu0 0.0
        %477 = vmatpush.msra.mxu0 0.0
        %478 = vmatpush.msra.mxu0 0.0
        %479 = vmatpush.msra.mxu0 0.0
        %480 = vmatpush.msra.mxu0 0.0
        %481 = vmatpush.msra.mxu0 0.0
        %482 = vmatpush.msra.mxu0 0.0
        %483 = vmatpush.msra.mxu0 0.0
        %484 = vmatpush.msra.mxu0 0.0
        %485 = vmatpush.msra.mxu0 0.0
        %486 = vmatpush.msra.mxu0 %v469
        %487 = vmatmul.f32.gmra.mxu0 %v466
        %v488 = vpop.f32.mrf.mxu0
        %v489 = vadd.f32 %v463, %v488
        %490 = vdwg.mxu0
        %vm491 = vcmask 261120
        %v493 = vsel %vm491, %v428, 0
        %v496 = vsel %vm491, %v458, 0
        %498 = vmatpush.xpose.msra.mxu0 0.0
        %499 = vmatpush.xpose.msra.mxu0 0.0
        %500 = vmatpush.xpose.msra.mxu0 0.0
        %501 = vmatpush.xpose.msra.mxu0 0.0
        %502 = vmatpush.xpose.msra.mxu0 0.0
        %503 = vmatpush.xpose.msra.mxu0 0.0
        %504 = vmatpush.xpose.msra.mxu0 0.0
        %505 = vmatpush.xpose.msra.mxu0 0.0
        %506 = vmatpush.xpose.msra.mxu0 0.0
        %507 = vmatpush.xpose.msra.mxu0 0.0
        %508 = vmatpush.xpose.msra.mxu0 0.0
        %509 = vmatpush.xpose.msra.mxu0 0.0
        %510 = vmatpush.xpose.msra.mxu0 0.0
        %511 = vmatpush.xpose.msra.mxu0 0.0
        %512 = vmatpush.xpose.msra.mxu0 0.0
        %513 = vmatpush.xpose.msra.mxu0 %v496
        %514 = vmatmul.f32.gmra.mxu0 %v493
        %v515 = vpop.f32.mrf.mxu0
        %v516 = vadd.f32 0.0, %v515
        %517 = vdwg.mxu0
        %vm518 = vcmask 64512
        %v520 = vsel %vm518, %v516, 0
        %522 = vmatpush.msra.mxu0 0.0
        %523 = vmatpush.msra.mxu0 0.0
        %524 = vmatpush.msra.mxu0 0.0
        %525 = vmatpush.msra.mxu0 0.0
        %526 = vmatpush.msra.mxu0 0.0
        %527 = vmatpush.msra.mxu0 0.0
        %528 = vmatpush.msra.mxu0 0.0
        %529 = vmatpush.msra.mxu0 0.0
        %530 = vmatpush.msra.mxu0 0.0
        %531 = vmatpush.msra.mxu0 0.0
        %532 = vmatpush.msra.mxu0 0.0
        %533 = vmatpush.msra.mxu0 0.0
        %534 = vmatpush.msra.mxu0 0.0
        %535 = vmatpush.msra.mxu0 0.0
        %536 = vmatpush.msra.mxu0 0.0
        %537 = vmatpush.msra.mxu0 %v489
        %538 = vmatmul.f32.gmra.mxu0 %v520
        %v539 = vpop.f32.mrf.mxu0
        %v540 = vadd.f32 0.0, %v539
        %541 = vdwg.mxu0
        %542 = vst.msk [vmem:[%s377] sm:$0xff] %vm491, %v540
        %s543 = sand.u32 %s258, 1
        %s544 = scalar_lea.sflag [#allocation4], %s543
        %s545 = sand.u32 %s258, 1
        %s546 = smul.addr %s545, 8
        %s547 = scalar_lea.vmem [#allocation3], %s546
        // Predicated region
        $region61: #{tpu_custom_call.1} parent=59 // pred_check
          %p548 = pneg %p268
        $region62: #{tpu_custom_call.1} parent=59 // pred_check_branch
          %550 = sbr.rel (%p548) target = $region64
        $region63: #{tpu_custom_call.1} parent=59 // pred_region
          %552 = vsyncadd %s544, 0
          %s553 = smul.addr %s25, 8
          %s554 = scalar_lea.hbm %s10, %s553
          %s556 = sshll.u32 %s547, 4
          %s557 = int_to_ptr.vmem [resolvable:$true] %s556
          %s558 = sshll.u32 %s554, 4
          %s559 = int_to_ptr.hbm [resolvable:$true] %s558
          %561 = dma.vmem_to_hbm [thread:$0]  %s557, 128, %s559, %s544
        $region64: #{tpu_custom_call.1} parent=59 // pred_fallthru
          _
      $region60: #{tpu_custom_call.1} parent=5 // pred_fallthru
        _
      %p562 = scmp.le.s32.totalorder 2, %s20
      // Predicated region
      $region65: #{tpu_custom_call.1} parent=5 // pred_check
        %p563 = pneg %p562
      $region66: #{tpu_custom_call.1} parent=5 // pred_check_branch
        %565 = sbr.rel (%p563) target = $region68
      $region67: #{tpu_custom_call.1} parent=5 // pred_region
        %s566 = ssub.s32 %s20, 2
        // Predicated region
        $region69: #{tpu_custom_call.1} parent=67 // pred_check
          %p567 = pneg %p274
        $region70: #{tpu_custom_call.1} parent=67 // pred_check_branch
          %569 = sbr.rel (%p567) target = $region72
        $region71: #{tpu_custom_call.1} parent=67 // pred_region
          %s570 = sand.u32 %s259, 1
          %s571 = scalar_lea.sflag [#allocation4], %s570
          %s572 = sand.u32 %s259, 1
          %s573 = smul.addr %s572, 8
          %s574 = scalar_lea.vmem [#allocation3], %s573
          %576 = dma.done %s571, 128
        $region72: #{tpu_custom_call.1} parent=67 // pred_fallthru
          _
      $region68: #{tpu_custom_call.1} parent=5 // pred_fallthru
        _
    $region6: #{tpu_custom_call.1} parent=1 // loop_footer
      %s24 = sadd.s32 1, %s20
    $region7: #{tpu_custom_call.1} parent=1 // loop_footer_branch
      %19 = sbr.rel target = $region3
    $region8: #{tpu_custom_call.1} parent=1 // loop_exit
      _
    %577 = vsyncpa [#allocation4], 1
    %s578 = scalar_lea.sflag [#allocation4], 1
    %579 = vsyncpa %s578, 1

</llo_original>
